<compile_context>
chip_gen: v6e
topology: v6e:2x2x1
jax: 0.10.0
libtpu: 0.0.40
codegen_flags: <defaults>
</compile_context>

<pallas_src>
import functools

import jax
import jax.numpy as jnp
from jax.experimental import pallas as pl
from jax.experimental.pallas import tpu as pltpu

_HID = 128          # padded hidden width (66 -> 128, 60 -> 128)
_ACT_LANE = 128     # padded action lane width used inside the kernel
_NEG_MASK = -1e30   # finite sentinel for padded action lanes (exp -> 0, no NaN)


def _round_up(n, m):
    return ((n + m - 1) // m) * m


def _batch_tiling(B, batch_tile):
    """Pick a batch tile (multiple of 128) and padded batch size."""
    tb_cap = max(128, _round_up(batch_tile, 128))
    b128 = _round_up(B, 128)
    tb = min(tb_cap, b128)
    # If everything fits one tile but the batch is big enough, split into two
    # tiles so v7x's two TensorCores can both take grid steps ("parallel" axis).
    # Measured-neutral on single-TC v5e/v6e.
    if tb == b128 and b128 >= 256:
        tb = _round_up(b128 // 2, 128)
    b_pad = _round_up(b128, tb)
    return tb, b_pad


def _q_network_kernel(act_sub, x_ref, w1_ref, b1_ref, w2_ref, b2_ref,
                      w3_ref, b3_ref, out_ref):
    x = x_ref[...]                                                    # (TB, obs)
    # Layer 1: Linear + ReLU (padded hidden lanes stay exactly 0 through ReLU)
    h1 = jnp.dot(x, w1_ref[...], preferred_element_type=jnp.float32)
    h1 = jnp.maximum(h1 + b1_ref[...], 0.0)                           # (TB, 128)
    # Layer 2: Linear + ReLU
    h2 = jnp.dot(h1, w2_ref[...], preferred_element_type=jnp.float32)
    h2 = jnp.maximum(h2 + b2_ref[...], 0.0)                           # (TB, 128)
    # Layer 3: Linear.  Padded action lanes get logits == -1e30 for free via the
    # bias padding (their weight columns are zero), so no iota/where mask needed.
    logits = jnp.dot(h2, w3_ref[...], preferred_element_type=jnp.float32)
    logits = logits + b3_ref[...]                                     # (TB, 128)
    # Numerically stable softmax over dim=1; reciprocal goes to the EUP slot.
    m = jnp.max(logits, axis=1, keepdims=True)
    e = jnp.exp(logits - m)
    denom = jnp.sum(e, axis=1, keepdims=True)
    probs = e * pl.reciprocal(denom, approx=True)                     # (TB, 128)
    # Transposed, lane-dense-over-batch writeback: (TB,128) -> (128,TB) via the
    # (otherwise idle) XLU, keep only the first `act_sub` sublanes.
    probs_t = probs.T                                                 # (128, TB)
    out_ref[...] = probs_t[:act_sub, :].astype(out_ref.dtype)         # (act_sub, TB)


def pad_params(params):
    """Pad weights/biases once (hoisted out of the per-step forward call)."""
    w1, b1, w2, b2, w3, b3 = (params["w1"], params["b1"], params["w2"],
                              params["b2"], params["w3"], params["b3"])
    obs, h1_dim = w1.shape
    h2_dim = w2.shape[1]
    n_actions = w3.shape[1]
    assert h1_dim <= _HID and h2_dim <= _HID and n_actions <= _ACT_LANE, (
        "network wider than the padded tile sizes (_HID / _ACT_LANE)")
    act_sub = max(8, _round_up(n_actions, 8))
    return {
        "w1": jnp.pad(w1, ((0, 0), (0, _HID - h1_dim))),
        "b1": jnp.pad(b1, ((0, 0), (0, _HID - h1_dim))),
        "w2": jnp.pad(w2, ((0, _HID - h1_dim), (0, _HID - h2_dim))),
        "b2": jnp.pad(b2, ((0, 0), (0, _HID - h2_dim))),
        "w3": jnp.pad(w3, ((0, _HID - h2_dim), (0, _ACT_LANE - n_actions))),
        # Action mask baked into the bias pad: padded lanes can never be the
        # row max, exp() underflows to exactly 0, softmax unchanged.
        "b3": jnp.pad(b3, ((0, 0), (0, _ACT_LANE - n_actions)),
                      constant_values=_NEG_MASK),
        "obs_size": obs,
        "n_actions": n_actions,
        "act_sub": act_sub,
    }


def q_network_forward(x, padded_params, *, batch_tile=1024):
    """x: (B, obs_size) f32.  padded_params: output of pad_params()."""
    pp = padded_params
    w1p, b1p, w2p, b2p, w3p, b3p = (pp["w1"], pp["b1"], pp["w2"],
                                    pp["b2"], pp["w3"], pp["b3"])
    obs = pp["obs_size"]
    n_actions = pp["n_actions"]
    act_sub = pp["act_sub"]

    B = x.shape[0]
    assert x.shape[1] == obs, "obs_size mismatch between x and params"

    tb, b_pad = _batch_tiling(B, batch_tile)
    xp = jnp.pad(x, ((0, b_pad - B), (0, 0))) if b_pad != B else x
    grid = (b_pad // tb,)

    kernel = functools.partial(_q_network_kernel, act_sub)

    out_t = pl.pallas_call(
        kernel,
        out_shape=jax.ShapeDtypeStruct((act_sub, b_pad), jnp.float32),
        grid=grid,
        in_specs=[
            pl.BlockSpec((tb, obs), lambda i: (i, 0)),            # x: tiled over batch
            pl.BlockSpec((obs, _HID), lambda i: (0, 0)),          # weights/biases resident
            pl.BlockSpec((1, _HID), lambda i: (0, 0)),
            pl.BlockSpec((_HID, _HID), lambda i: (0, 0)),
            pl.BlockSpec((1, _HID), lambda i: (0, 0)),
            pl.BlockSpec((_HID, _ACT_LANE), lambda i: (0, 0)),
            pl.BlockSpec((1, _ACT_LANE), lambda i: (0, 0)),
        ],
        # Transposed output: actions on sublanes, batch lane-dense -> compact,
        # unmasked lane-dense stores and ~16x less writeback than (b_pad, 128).
        out_specs=pl.BlockSpec((act_sub, tb), lambda i: (0, i)),
        compiler_params=pltpu.CompilerParams(
            dimension_semantics=("parallel",),
            vmem_limit_bytes=32 * 1024 * 1024,
        ),
    )(xp, w1p, b1p, w2p, b2p, w3p, b3p)

    # Slice off padded action sublanes / batch padding; back to (B, n_actions).
    return out_t[:n_actions, :B].T


def init_params(key, obs_size, n_actions):
    """Deterministic synthetic init (uniform, roughly PyTorch Linear scale)."""
    ks = jax.random.split(key, 6)

    def lin(kw, kb, fan_in, fan_out):
        bound = 1.0 / jnp.sqrt(fan_in)
        w = jax.random.uniform(kw, (fan_in, fan_out), jnp.float32, -bound, bound)
        b = jax.random.uniform(kb, (1, fan_out), jnp.float32, -bound, bound)
        return w, b

    w1, b1 = lin(ks[0], ks[1], obs_size, 66)
    w2, b2 = lin(ks[2], ks[3], 66, 60)
    w3, b3 = lin(ks[4], ks[5], 60, n_actions)
    return {"w1": w1, "b1": b1, "w2": w2, "b2": b2, "w3": w3, "b3": b3}


def _reference_forward(x, p):
    h1 = jnp.maximum(x @ p["w1"] + p["b1"], 0.0)
    h2 = jnp.maximum(h1 @ p["w2"] + p["b2"], 0.0)
    logits = h2 @ p["w3"] + p["b3"]
    return jax.nn.softmax(logits, axis=1)


if __name__ == "__main__":
    key = jax.random.PRNGKey(0)
    k_x, k_p, k_x2 = jax.random.split(key, 3)

    batch, obs_size, n_actions = 8, 16, 4
    x = jax.random.normal(k_x, (batch, obs_size), dtype=jnp.float32)
    params = init_params(k_p, obs_size, n_actions)
    padded = pad_params(params)          # hoisted: pad once, reuse every step

    out = jax.block_until_ready(q_network_forward(x, padded))
    ref = _reference_forward(x, params)
    assert out.shape == (batch, n_actions)
    # approx reciprocal in the softmax denominator -> slightly relaxed tolerance
    assert jnp.allclose(out, ref, atol=2e-3, rtol=2e-3), "mismatch vs reference"
    assert jnp.allclose(jnp.sum(out, axis=1), 1.0, atol=2e-3), "softmax rows must sum to 1"

    # Second check: ragged batch + multi-step grid (exercises tiling/padding path).
    batch2 = 300
    x2 = jax.random.normal(k_x2, (batch2, obs_size), dtype=jnp.float32)
    out2 = jax.block_until_ready(q_network_forward(x2, padded, batch_tile=128))
    ref2 = _reference_forward(x2, params)
    assert out2.shape == (batch2, n_actions)
    assert jnp.allclose(out2, ref2, atol=2e-3, rtol=2e-3), "mismatch vs reference (ragged batch)"

    print("KERNEL_OK")
</pallas_src>

<mosaic_0001>
module attributes {stable_mosaic.version = 11 : i64} {
  func.func @_q_network_kernel(%arg0: i32, %arg1: memref<128x16xf32, #tpu.memory_space<vmem>>, %arg2: memref<16x128xf32, #tpu.memory_space<vmem>>, %arg3: memref<1x128xf32, #tpu.memory_space<vmem>>, %arg4: memref<128x128xf32, #tpu.memory_space<vmem>>, %arg5: memref<1x128xf32, #tpu.memory_space<vmem>>, %arg6: memref<128x128xf32, #tpu.memory_space<vmem>>, %arg7: memref<1x128xf32, #tpu.memory_space<vmem>>, %arg8: memref<8x128xf32, #tpu.memory_space<vmem>>) attributes {dimension_semantics = [#tpu.dimension_semantics<parallel>], iteration_bounds = array<i64: 1>, scalar_prefetch = 0 : i64, scratch_operands = 0 : i64, tpu.core_type = #tpu.core_type<tc>, window_params = [{transform_indices = @transform_0, window_bounds = array<i64: 128, 16>}, {pipeline_mode = #tpu.pipeline_mode<synchronous>, transform_indices = @transform_1, window_bounds = array<i64: 16, 128>}, {pipeline_mode = #tpu.pipeline_mode<synchronous>, transform_indices = @transform_2, window_bounds = array<i64: 1, 128>}, {pipeline_mode = #tpu.pipeline_mode<synchronous>, transform_indices = @transform_3, window_bounds = array<i64: 128, 128>}, {pipeline_mode = #tpu.pipeline_mode<synchronous>, transform_indices = @transform_4, window_bounds = array<i64: 1, 128>}, {pipeline_mode = #tpu.pipeline_mode<synchronous>, transform_indices = @transform_5, window_bounds = array<i64: 128, 128>}, {pipeline_mode = #tpu.pipeline_mode<synchronous>, transform_indices = @transform_6, window_bounds = array<i64: 1, 128>}, {transform_indices = @transform_7, window_bounds = array<i64: 8, 128>}]} {
    %c0 = arith.constant 0 : index
    %c0_0 = arith.constant 0 : index
    %0 = vector.load %arg1[%c0, %c0_0] : memref<128x16xf32, #tpu.memory_space<vmem>>, vector<128x16xf32>
    %c0_1 = arith.constant 0 : index
    %c0_2 = arith.constant 0 : index
    %1 = vector.load %arg2[%c0_1, %c0_2] : memref<16x128xf32, #tpu.memory_space<vmem>>, vector<16x128xf32>
    %cst = arith.constant dense<0.000000e+00> : vector<128x128xf32>
    %2 = tpu.matmul %0, %1, %cst {dimension_numbers = #tpu.dot_dimension_numbers<[1], [0], [0], [1], [0, 0, 1, 1], [], []>} : vector<128x16xf32>, vector<16x128xf32>, vector<128x128xf32> -> vector<128x128xf32>
    %c0_3 = arith.constant 0 : index
    %c0_4 = arith.constant 0 : index
    %3 = vector.load %arg3[%c0_3, %c0_4] : memref<1x128xf32, #tpu.memory_space<vmem>>, vector<1x128xf32>
    %4 = vector.broadcast %3 : vector<1x128xf32> to vector<128x128xf32>
    %5 = arith.addf %2, %4 : vector<128x128xf32>
    %cst_5 = arith.constant 0.000000e+00 : f32
    %6 = vector.broadcast %cst_5 : f32 to vector<128x128xf32>
    %7 = arith.maximumf %5, %6 : vector<128x128xf32>
    %c0_6 = arith.constant 0 : index
    %c0_7 = arith.constant 0 : index
    %8 = vector.load %arg4[%c0_6, %c0_7] : memref<128x128xf32, #tpu.memory_space<vmem>>, vector<128x128xf32>
    %cst_8 = arith.constant dense<0.000000e+00> : vector<128x128xf32>
    %9 = tpu.matmul %7, %8, %cst_8 {dimension_numbers = #tpu.dot_dimension_numbers<[1], [0], [0], [1], [0, 0, 1, 1], [], []>} : vector<128x128xf32>, vector<128x128xf32>, vector<128x128xf32> -> vector<128x128xf32>
    %c0_9 = arith.constant 0 : index
    %c0_10 = arith.constant 0 : index
    %10 = vector.load %arg5[%c0_9, %c0_10] : memref<1x128xf32, #tpu.memory_space<vmem>>, vector<1x128xf32>
    %11 = vector.broadcast %10 : vector<1x128xf32> to vector<128x128xf32>
    %12 = arith.addf %9, %11 : vector<128x128xf32>
    %cst_11 = arith.constant 0.000000e+00 : f32
    %13 = vector.broadcast %cst_11 : f32 to vector<128x128xf32>
    %14 = arith.maximumf %12, %13 : vector<128x128xf32>
    %c0_12 = arith.constant 0 : index
    %c0_13 = arith.constant 0 : index
    %15 = vector.load %arg6[%c0_12, %c0_13] : memref<128x128xf32, #tpu.memory_space<vmem>>, vector<128x128xf32>
    %cst_14 = arith.constant dense<0.000000e+00> : vector<128x128xf32>
    %16 = tpu.matmul %14, %15, %cst_14 {dimension_numbers = #tpu.dot_dimension_numbers<[1], [0], [0], [1], [0, 0, 1, 1], [], []>} : vector<128x128xf32>, vector<128x128xf32>, vector<128x128xf32> -> vector<128x128xf32>
    %c0_15 = arith.constant 0 : index
    %c0_16 = arith.constant 0 : index
    %17 = vector.load %arg7[%c0_15, %c0_16] : memref<1x128xf32, #tpu.memory_space<vmem>>, vector<1x128xf32>
    %18 = vector.broadcast %17 : vector<1x128xf32> to vector<128x128xf32>
    %19 = arith.addf %16, %18 : vector<128x128xf32>
    %cst_17 = arith.constant dense<0xFF800000> : vector<128xf32>
    %20 = vector.multi_reduction <maximumf>, %19, %cst_17 [1] : vector<128x128xf32> to vector<128xf32>
    %21 = vector.shape_cast %20 : vector<128xf32> to vector<128x1xf32>
    %22 = vector.broadcast %21 : vector<128x1xf32> to vector<128x128xf32>
    %23 = arith.subf %19, %22 : vector<128x128xf32>
    %24 = math.exp %23 : vector<128x128xf32>
    %cst_18 = arith.constant dense<0.000000e+00> : vector<128xf32>
    %25 = vector.multi_reduction <add>, %24, %cst_18 [1] : vector<128x128xf32> to vector<128xf32>
    %26 = vector.shape_cast %25 : vector<128xf32> to vector<128x1xf32>
    %27 = tpu.reciprocal %26 {approx = true} : vector<128x1xf32> -> vector<128x1xf32>
    %28 = vector.broadcast %27 : vector<128x1xf32> to vector<128x128xf32>
    %29 = arith.mulf %24, %28 : vector<128x128xf32>
    %30 = tpu.transpose %29, [1, 0] : vector<128x128xf32> -> vector<128x128xf32>
    %31 = vector.extract_strided_slice %30 {offsets = [0, 0], sizes = [8, 128], strides = [1, 1]} : vector<128x128xf32> to vector<8x128xf32>
    %c0_19 = arith.constant 0 : index
    %c0_20 = arith.constant 0 : index
    %32 = vector.load %arg8[%c0_19, %c0_20] : memref<8x128xf32, #tpu.memory_space<vmem>>, vector<8x128xf32>
    tpu.vector_store %arg8[%c0_19, %c0_20], %31 {strides = array<i32>} : memref<8x128xf32, #tpu.memory_space<vmem>>, vector<8x128xf32>,
    return
  }
  func.func @transform_0(%arg0: i32) -> (i32, i32) {
    %c0_i32 = arith.constant 0 : i32
    %c0_i32_0 = arith.constant 0 : i32
    return %arg0, %c0_i32 : i32, i32
  }
  func.func @transform_1(%arg0: i32) -> (i32, i32) {
    %c0_i32 = arith.constant 0 : i32
    %c0_i32_0 = arith.constant 0 : i32
    %c0_i32_1 = arith.constant 0 : i32
    return %c0_i32, %c0_i32_0 : i32, i32
  }
  func.func @transform_2(%arg0: i32) -> (i32, i32) {
    %c0_i32 = arith.constant 0 : i32
    %c0_i32_0 = arith.constant 0 : i32
    %c0_i32_1 = arith.constant 0 : i32
    return %c0_i32, %c0_i32_0 : i32, i32
  }
  func.func @transform_3(%arg0: i32) -> (i32, i32) {
    %c0_i32 = arith.constant 0 : i32
    %c0_i32_0 = arith.constant 0 : i32
    %c0_i32_1 = arith.constant 0 : i32
    return %c0_i32, %c0_i32_0 : i32, i32
  }
  func.func @transform_4(%arg0: i32) -> (i32, i32) {
    %c0_i32 = arith.constant 0 : i32
    %c0_i32_0 = arith.constant 0 : i32
    %c0_i32_1 = arith.constant 0 : i32
    return %c0_i32, %c0_i32_0 : i32, i32
  }
  func.func @transform_5(%arg0: i32) -> (i32, i32) {
    %c0_i32 = arith.constant 0 : i32
    %c0_i32_0 = arith.constant 0 : i32
    %c0_i32_1 = arith.constant 0 : i32
    return %c0_i32, %c0_i32_0 : i32, i32
  }
  func.func @transform_6(%arg0: i32) -> (i32, i32) {
    %c0_i32 = arith.constant 0 : i32
    %c0_i32_0 = arith.constant 0 : i32
    %c0_i32_1 = arith.constant 0 : i32
    return %c0_i32, %c0_i32_0 : i32, i32
  }
  func.func @transform_7(%arg0: i32) -> (i32, i32) {
    %c0_i32 = arith.constant 0 : i32
    %c0_i32_0 = arith.constant 0 : i32
    return %c0_i32, %arg0 : i32, i32
  }
}

</mosaic_0001>

<llo_original>
// kernel: tpu_custom_call.1
$region0: #{tpu_custom_call.1}
  #allocation0 [shape = 'u32[]', space=smem, size = 0x4, offset = 0x4, fixed_abs, tag = 'smem constant byte address 0x4 - core index']
  #allocation1 [shape = 'u32[144,128]{1,0:T(1,128)}', space=vmem, size = 0x12000, scoped, tag = 'internal scratch']
  %s0 = inlined_call_operand.vmem [shape: f32[128,16], index: 0, kind: input, shape index: {}]
  %s1 = inlined_call_operand.vmem [shape: f32[16,128], index: 1, kind: input, shape index: {}]
  %s2 = inlined_call_operand.vmem [shape: f32[1,128], index: 2, kind: input, shape index: {}]
  %s3 = inlined_call_operand.vmem [shape: f32[128,128], index: 3, kind: input, shape index: {}]
  %s4 = inlined_call_operand.vmem [shape: f32[1,128], index: 4, kind: input, shape index: {}]
  %s5 = inlined_call_operand.hbm [shape: f32[128,128], index: 5, kind: input, shape index: {}]
  %s6 = inlined_call_operand.vmem [shape: f32[1,128], index: 6, kind: input, shape index: {}]
  %s7 = inlined_call_operand.hbm [shape: f32[8,128], index: 7, kind: output, shape index: {}]
  %s8 = sld [smem:[#allocation0]]
  $region42: #{tpu_custom_call.1} parent=0
    _
  %s10 = ssub.s32 1, %s8
  %s11 = scalar_select 0, %s10, %s8
  $region1: #{tpu_custom_call.1} parent=0
    #allocation2 [shape = 'u8[65536]{0}', space=vmem, size = 0x10000, scoped, tag = 'input window, operand 5, single buffered']
    #allocation3 [shape = 's32[1]{0}', space=sflag, size = 0x4, scoped, tag = 'scoped memory for tpu_custom_call.1']
    #allocation4 [shape = 's32[1]{0}', space=sflag, size = 0x4, scoped, tag = 'scoped memory for tpu_custom_call.1']
    #allocation5 [shape = 'u8[4096]{0}', space=vmem, size = 0x1000, scoped, tag = 'output window, operand 0, single buffered']
    %12 = vsyncpa [#allocation3], 0
    %13 = vsyncpa [#allocation4], 0
    // Predicated region
    $region2: #{tpu_custom_call.1} parent=1 // pred_check
      _
    $region3: #{tpu_custom_call.1} parent=1 // pred_check_branch
      %15 = sbr.rel (0) target = $region5
    $region4: #{tpu_custom_call.1} parent=1 // pred_region
      _
    $region5: #{tpu_custom_call.1} parent=1 // pred_fallthru
      _
    // Predicated region
    $region6: #{tpu_custom_call.1} parent=1 // pred_check
      _
    $region7: #{tpu_custom_call.1} parent=1 // pred_check_branch
      %17 = sbr.rel (0) target = $region9
    $region8: #{tpu_custom_call.1} parent=1 // pred_region
      _
    $region9: #{tpu_custom_call.1} parent=1 // pred_fallthru
      _
    // Predicated region
    $region10: #{tpu_custom_call.1} parent=1 // pred_check
      _
    $region11: #{tpu_custom_call.1} parent=1 // pred_check_branch
      %19 = sbr.rel (0) target = $region13
    $region12: #{tpu_custom_call.1} parent=1 // pred_region
      _
    $region13: #{tpu_custom_call.1} parent=1 // pred_fallthru
      _
    // Predicated region
    $region14: #{tpu_custom_call.1} parent=1 // pred_check
      _
    $region15: #{tpu_custom_call.1} parent=1 // pred_check_branch
      %21 = sbr.rel (0) target = $region17
    $region16: #{tpu_custom_call.1} parent=1 // pred_region
      _
    $region17: #{tpu_custom_call.1} parent=1 // pred_fallthru
      _
    // Predicated region
    $region18: #{tpu_custom_call.1} parent=1 // pred_check
      _
    $region19: #{tpu_custom_call.1} parent=1 // pred_check_branch
      %23 = sbr.rel (0) target = $region21
    $region20: #{tpu_custom_call.1} parent=1 // pred_region
      _
    $region21: #{tpu_custom_call.1} parent=1 // pred_fallthru
      _
    // Predicated region
    $region22: #{tpu_custom_call.1} parent=1 // pred_check
      _
    $region23: #{tpu_custom_call.1} parent=1 // pred_check_branch
      %25 = sbr.rel (0) target = $region25
    $region24: #{tpu_custom_call.1} parent=1 // pred_region
      %s27 = ssub.s32 2048, 2048
      %28 = vsyncadd [#allocation3], %s27
      %s29 = sshll.u32 [#allocation2], 4
      %s30 = int_to_ptr.vmem [resolvable:$true] %s29
      %35 = dma.hbm_to_vmem [thread:$0]  %s5, 2048, %s30, [#allocation3], 128, 128, 8
    $region25: #{tpu_custom_call.1} parent=1 // pred_fallthru
      _
    // Predicated region
    $region26: #{tpu_custom_call.1} parent=1 // pred_check
      _
    $region27: #{tpu_custom_call.1} parent=1 // pred_check_branch
      %37 = sbr.rel (0) target = $region29
    $region28: #{tpu_custom_call.1} parent=1 // pred_region
      _
    $region29: #{tpu_custom_call.1} parent=1 // pred_fallthru
      _
    // Predicated region
    $region30: #{tpu_custom_call.1} parent=1 // pred_check
      _
    $region31: #{tpu_custom_call.1} parent=1 // pred_check_branch
      %39 = sbr.rel (0) target = $region33
    $region32: #{tpu_custom_call.1} parent=1 // pred_region
      %40 = dma.done [#allocation3], 2048
    $region33: #{tpu_custom_call.1} parent=1 // pred_fallthru
      _
    %v41 = vld [vmem:[%s0] sm:$0xff]
    %v42 = vld [vmem:[%s0 + $0x8] sm:$0xff]
    %v43 = vld [vmem:[%s0 + $0x10] sm:$0xff]
    %v44 = vld [vmem:[%s0 + $0x18] sm:$0xff]
    %v45 = vld [vmem:[%s0 + $0x20] sm:$0xff]
    %v46 = vld [vmem:[%s0 + $0x28] sm:$0xff]
    %v47 = vld [vmem:[%s0 + $0x30] sm:$0xff]
    %v48 = vld [vmem:[%s0 + $0x38] sm:$0xff]
    %v49 = vld [vmem:[%s0 + $0x40] sm:$0xff]
    %v50 = vld [vmem:[%s0 + $0x48] sm:$0xff]
    %v51 = vld [vmem:[%s0 + $0x50] sm:$0xff]
    %v52 = vld [vmem:[%s0 + $0x58] sm:$0xff]
    %v53 = vld [vmem:[%s0 + $0x60] sm:$0xff]
    %v54 = vld [vmem:[%s0 + $0x68] sm:$0xff]
    %v55 = vld [vmem:[%s0 + $0x70] sm:$0xff]
    %v56 = vld [vmem:[%s0 + $0x78] sm:$0xff]
    %v57 = vld [vmem:[%s1] sm:$0xff]
    %v58 = vld [vmem:[%s1 + $0x8] sm:$0xff]
    %v59 = vld [vmem:[%s2] sm:$0x1]
    %v61 = vlaneseq
    %v62 = vshrl.u32 %v61, 7
    %v63 = vsub.s32 0, %v62
    %v64 = vrot.slane %v59, %v63
    %vm66 = vcmask 130048
    %v68 = vsel %vm66, %v41, 0
    %v71 = vsel %vm66, %v42, 0
    %v74 = vsel %vm66, %v43, 0
    %v77 = vsel %vm66, %v44, 0
    %v80 = vsel %vm66, %v45, 0
    %v83 = vsel %vm66, %v46, 0
    %v86 = vsel %vm66, %v47, 0
    %v89 = vsel %vm66, %v48, 0
    %v92 = vsel %vm66, %v49, 0
    %v95 = vsel %vm66, %v50, 0
    %v98 = vsel %vm66, %v51, 0
    %v101 = vsel %vm66, %v52, 0
    %v104 = vsel %vm66, %v53, 0
    %v107 = vsel %vm66, %v54, 0
    %v110 = vsel %vm66, %v55, 0
    %v113 = vsel %vm66, %v56, 0
    %115 = vmatprep.subr.mxu0 0.0
    %116 = vmatpush1.msra.mxu0 0.0
    %117 = vmatprep.subr.mxu0 0.0
    %118 = vmatpush1.msra.mxu0 0.0
    %119 = vmatprep.subr.mxu0 0.0
    %120 = vmatpush1.msra.mxu0 0.0
    %121 = vmatprep.subr.mxu0 0.0
    %122 = vmatpush1.msra.mxu0 0.0
    %123 = vmatprep.subr.mxu0 0.0
    %124 = vmatpush1.msra.mxu0 0.0
    %125 = vmatprep.subr.mxu0 0.0
    %126 = vmatpush1.msra.mxu0 0.0
    %127 = vmatprep.subr.mxu0 0.0
    %128 = vmatpush1.msra.mxu0 0.0
    %129 = vmatprep.subr.mxu0 0.0
    %130 = vmatpush1.msra.mxu0 0.0
    %131 = vmatprep.subr.mxu0 0.0
    %132 = vmatpush1.msra.mxu0 0.0
    %133 = vmatprep.subr.mxu0 0.0
    %134 = vmatpush1.msra.mxu0 0.0
    %135 = vmatprep.subr.mxu0 0.0
    %136 = vmatpush1.msra.mxu0 0.0
    %137 = vmatprep.subr.mxu0 0.0
    %138 = vmatpush1.msra.mxu0 0.0
    %139 = vmatprep.subr.mxu0 0.0
    %140 = vmatpush1.msra.mxu0 0.0
    %141 = vmatprep.subr.mxu0 0.0
    %142 = vmatpush1.msra.mxu0 0.0
    %143 = vmatprep.subr.mxu0 0.0
    %144 = vmatpush1.msra.mxu0 %v58
    %145 = vmatprep.subr.mxu0 0.0
    %146 = vmatpush1.msra.mxu0 %v57
    %147 = vmatprep.subr.mxu0 0.0
    %148 = vmatpush2.msra.mxu0 0.0
    %149 = vmatprep.subr.mxu0 0.0
    %150 = vmatpush2.msra.mxu0 0.0
    %151 = vmatprep.subr.mxu0 0.0
    %152 = vmatpush2.msra.mxu0 0.0
    %153 = vmatprep.subr.mxu0 0.0
    %154 = vmatpush2.msra.mxu0 0.0
    %155 = vmatprep.subr.mxu0 0.0
    %156 = vmatpush2.msra.mxu0 0.0
    %157 = vmatprep.subr.mxu0 0.0
    %158 = vmatpush2.msra.mxu0 0.0
    %159 = vmatprep.subr.mxu0 0.0
    %160 = vmatpush2.msra.mxu0 0.0
    %161 = vmatprep.subr.mxu0 0.0
    %162 = vmatpush2.msra.mxu0 0.0
    %163 = vmatprep.subr.mxu0 0.0
    %164 = vmatpush2.msra.mxu0 0.0
    %165 = vmatprep.subr.mxu0 0.0
    %166 = vmatpush2.msra.mxu0 0.0
    %167 = vmatprep.subr.mxu0 0.0
    %168 = vmatpush2.msra.mxu0 0.0
    %169 = vmatprep.subr.mxu0 0.0
    %170 = vmatpush2.msra.mxu0 0.0
    %171 = vmatprep.subr.mxu0 0.0
    %172 = vmatpush2.msra.mxu0 0.0
    %173 = vmatprep.subr.mxu0 0.0
    %174 = vmatpush2.msra.mxu0 0.0
    %175 = vmatprep.subr.mxu0 0.0
    %176 = vmatpush2.msra.mxu0 0.0
    %177 = vmatprep.subr.mxu0 0.0
    %178 = vmatpush2.msra.mxu0 0.0
    %179 = vmatprep.mubr.f32.mxu0 0.0
    %180 = vmatmul.mubr.f32.gmra.mxu0 %v68
    %v181 = vpop.f32.mrf.mxu0
    %v182 = vadd.f32 %v64, %v181
    %v183 = vpop.f32.mrf.mxu0
    %184 = vmatprep.mubr.f32.mxu0 0.0
    %185 = vmatmul.mubr.f32.gmra.mxu0 %v71
    %v186 = vpop.f32.mrf.mxu0
    %v187 = vadd.f32 %v64, %v186
    %v188 = vpop.f32.mrf.mxu0
    %189 = vmatprep.mubr.f32.mxu0 0.0
    %190 = vmatmul.mubr.f32.gmra.mxu0 %v74
    %v191 = vpop.f32.mrf.mxu0
    %v192 = vadd.f32 %v64, %v191
    %v193 = vpop.f32.mrf.mxu0
    %194 = vmatprep.mubr.f32.mxu0 0.0
    %195 = vmatmul.mubr.f32.gmra.mxu0 %v77
    %v196 = vpop.f32.mrf.mxu0
    %v197 = vadd.f32 %v64, %v196
    %v198 = vpop.f32.mrf.mxu0
    %199 = vmatprep.mubr.f32.mxu0 0.0
    %200 = vmatmul.mubr.f32.gmra.mxu0 %v80
    %v201 = vpop.f32.mrf.mxu0
    %v202 = vadd.f32 %v64, %v201
    %v203 = vpop.f32.mrf.mxu0
    %204 = vmatprep.mubr.f32.mxu0 0.0
    %205 = vmatmul.mubr.f32.gmra.mxu0 %v83
    %v206 = vpop.f32.mrf.mxu0
    %v207 = vadd.f32 %v64, %v206
    %v208 = vpop.f32.mrf.mxu0
    %209 = vmatprep.mubr.f32.mxu0 0.0
    %210 = vmatmul.mubr.f32.gmra.mxu0 %v86
    %v211 = vpop.f32.mrf.mxu0
    %v212 = vadd.f32 %v64, %v211
    %v213 = vpop.f32.mrf.mxu0
    %214 = vmatprep.mubr.f32.mxu0 0.0
    %215 = vmatmul.mubr.f32.gmra.mxu0 %v89
    %v216 = vpop.f32.mrf.mxu0
    %v217 = vadd.f32 %v64, %v216
    %v218 = vpop.f32.mrf.mxu0
    %219 = vmatprep.mubr.f32.mxu0 0.0
    %220 = vmatmul.mubr.f32.gmra.mxu0 %v92
    %v221 = vpop.f32.mrf.mxu0
    %v222 = vadd.f32 %v64, %v221
    %v223 = vpop.f32.mrf.mxu0
    %224 = vmatprep.mubr.f32.mxu0 0.0
    %225 = vmatmul.mubr.f32.gmra.mxu0 %v95
    %v226 = vpop.f32.mrf.mxu0
    %v227 = vadd.f32 %v64, %v226
    %v228 = vpop.f32.mrf.mxu0
    %229 = vmatprep.mubr.f32.mxu0 0.0
    %230 = vmatmul.mubr.f32.gmra.mxu0 %v98
    %v231 = vpop.f32.mrf.mxu0
    %v232 = vadd.f32 %v64, %v231
    %v233 = vpop.f32.mrf.mxu0
    %234 = vmatprep.mubr.f32.mxu0 0.0
    %235 = vmatmul.mubr.f32.gmra.mxu0 %v101
    %v236 = vpop.f32.mrf.mxu0
    %v237 = vadd.f32 %v64, %v236
    %v238 = vpop.f32.mrf.mxu0
    %239 = vmatprep.mubr.f32.mxu0 0.0
    %240 = vmatmul.mubr.f32.gmra.mxu0 %v104
    %v241 = vpop.f32.mrf.mxu0
    %v242 = vadd.f32 %v64, %v241
    %v243 = vpop.f32.mrf.mxu0
    %244 = vmatprep.mubr.f32.mxu0 0.0
    %245 = vmatmul.mubr.f32.gmra.mxu0 %v107
    %v246 = vpop.f32.mrf.mxu0
    %v247 = vadd.f32 %v64, %v246
    %v248 = vpop.f32.mrf.mxu0
    %249 = vmatprep.mubr.f32.mxu0 0.0
    %250 = vmatmul.mubr.f32.gmra.mxu0 %v110
    %v251 = vpop.f32.mrf.mxu0
    %v252 = vadd.f32 %v64, %v251
    %v253 = vpop.f32.mrf.mxu0
    %254 = vmatprep.mubr.f32.mxu0 0.0
    %255 = vmatmul.mubr.f32.gmra.mxu0 %v113
    %v256 = vpop.f32.mrf.mxu0
    %v257 = vadd.f32 %v64, %v256
    %v258 = vpop.f32.mrf.mxu0
    %259 = vdwg.mxu0
    %v260 = vmax.f32 %v182, 0.0
    %v261 = vmax.f32 %v187, 0.0
    %v262 = vmax.f32 %v192, 0.0
    %v263 = vmax.f32 %v197, 0.0
    %v264 = vmax.f32 %v202, 0.0
    %v265 = vmax.f32 %v207, 0.0
    %v266 = vmax.f32 %v212, 0.0
    %v267 = vmax.f32 %v217, 0.0
    %v268 = vmax.f32 %v222, 0.0
    %v269 = vmax.f32 %v227, 0.0
    %v270 = vmax.f32 %v232, 0.0
    %v271 = vmax.f32 %v237, 0.0
    %v272 = vmax.f32 %v242, 0.0
    %v273 = vmax.f32 %v247, 0.0
    %v274 = vmax.f32 %v252, 0.0
    %v275 = vmax.f32 %v257, 0.0
    %v276 = vld [vmem:[%s3] sm:$0xff]
    %v277 = vld [vmem:[%s3 + $0x8] sm:$0xff]
    %v278 = vld [vmem:[%s3 + $0x10] sm:$0xff]
    %v279 = vld [vmem:[%s3 + $0x18] sm:$0xff]
    %v280 = vld [vmem:[%s3 + $0x20] sm:$0xff]
    %v281 = vld [vmem:[%s3 + $0x28] sm:$0xff]
    %v282 = vld [vmem:[%s3 + $0x30] sm:$0xff]
    %v283 = vld [vmem:[%s3 + $0x38] sm:$0xff]
    %v284 = vld [vmem:[%s3 + $0x40] sm:$0xff]
    %v285 = vld [vmem:[%s3 + $0x48] sm:$0xff]
    %v286 = vld [vmem:[%s3 + $0x50] sm:$0xff]
    %v287 = vld [vmem:[%s3 + $0x58] sm:$0xff]
    %v288 = vld [vmem:[%s3 + $0x60] sm:$0xff]
    %v289 = vld [vmem:[%s3 + $0x68] sm:$0xff]
    %v290 = vld [vmem:[%s3 + $0x70] sm:$0xff]
    %v291 = vld [vmem:[%s3 + $0x78] sm:$0xff]
    %v292 = vld [vmem:[%s4] sm:$0x1]
    %v294 = vlaneseq
    %v295 = vshrl.u32 %v294, 7
    %v296 = vsub.s32 0, %v295
    %v297 = vrot.slane %v292, %v296
    %299 = vmatprep.subr.mxu0 0.0
    %300 = vmatpush1.msra.mxu0 %v291
    %301 = vmatprep.subr.mxu0 0.0
    %302 = vmatpush1.msra.mxu0 %v290
    %303 = vmatprep.subr.mxu0 0.0
    %304 = vmatpush1.msra.mxu0 %v289
    %305 = vmatprep.subr.mxu0 0.0
    %306 = vmatpush1.msra.mxu0 %v288
    %307 = vmatprep.subr.mxu0 0.0
    %308 = vmatpush1.msra.mxu0 %v287
    %309 = vmatprep.subr.mxu0 0.0
    %310 = vmatpush1.msra.mxu0 %v286
    %311 = vmatprep.subr.mxu0 0.0
    %312 = vmatpush1.msra.mxu0 %v285
    %313 = vmatprep.subr.mxu0 0.0
    %314 = vmatpush1.msra.mxu0 %v284
    %315 = vmatprep.subr.mxu0 0.0
    %316 = vmatpush1.msra.mxu0 %v283
    %317 = vmatprep.subr.mxu0 0.0
    %318 = vmatpush1.msra.mxu0 %v282
    %319 = vmatprep.subr.mxu0 0.0
    %320 = vmatpush1.msra.mxu0 %v281
    %321 = vmatprep.subr.mxu0 0.0
    %322 = vmatpush1.msra.mxu0 %v280
    %323 = vmatprep.subr.mxu0 0.0
    %324 = vmatpush1.msra.mxu0 %v279
    %325 = vmatprep.subr.mxu0 0.0
    %326 = vmatpush1.msra.mxu0 %v278
    %327 = vmatprep.subr.mxu0 0.0
    %328 = vmatpush1.msra.mxu0 %v277
    %329 = vmatprep.subr.mxu0 0.0
    %330 = vmatpush1.msra.mxu0 %v276
    %331 = vmatprep.subr.mxu0 0.0
    %332 = vmatpush2.msra.mxu0 0.0
    %333 = vmatprep.subr.mxu0 0.0
    %334 = vmatpush2.msra.mxu0 0.0
    %335 = vmatprep.subr.mxu0 0.0
    %336 = vmatpush2.msra.mxu0 0.0
    %337 = vmatprep.subr.mxu0 0.0
    %338 = vmatpush2.msra.mxu0 0.0
    %339 = vmatprep.subr.mxu0 0.0
    %340 = vmatpush2.msra.mxu0 0.0
    %341 = vmatprep.subr.mxu0 0.0
    %342 = vmatpush2.msra.mxu0 0.0
    %343 = vmatprep.subr.mxu0 0.0
    %344 = vmatpush2.msra.mxu0 0.0
    %345 = vmatprep.subr.mxu0 0.0
    %346 = vmatpush2.msra.mxu0 0.0
    %347 = vmatprep.subr.mxu0 0.0
    %348 = vmatpush2.msra.mxu0 0.0
    %349 = vmatprep.subr.mxu0 0.0
    %350 = vmatpush2.msra.mxu0 0.0
    %351 = vmatprep.subr.mxu0 0.0
    %352 = vmatpush2.msra.mxu0 0.0
    %353 = vmatprep.subr.mxu0 0.0
    %354 = vmatpush2.msra.mxu0 0.0
    %355 = vmatprep.subr.mxu0 0.0
    %356 = vmatpush2.msra.mxu0 0.0
    %357 = vmatprep.subr.mxu0 0.0
    %358 = vmatpush2.msra.mxu0 0.0
    %359 = vmatprep.subr.mxu0 0.0
    %360 = vmatpush2.msra.mxu0 0.0
    %361 = vmatprep.subr.mxu0 0.0
    %362 = vmatpush2.msra.mxu0 0.0
    %363 = vmatprep.mubr.f32.mxu0 0.0
    %364 = vmatmul.mubr.f32.gmra.mxu0 %v260
    %v365 = vpop.f32.mrf.mxu0
    %v366 = vadd.f32 %v297, %v365
    %v367 = vpop.f32.mrf.mxu0
    %368 = vmatprep.mubr.f32.mxu0 0.0
    %369 = vmatmul.mubr.f32.gmra.mxu0 %v261
    %v370 = vpop.f32.mrf.mxu0
    %v371 = vadd.f32 %v297, %v370
    %v372 = vpop.f32.mrf.mxu0
    %373 = vmatprep.mubr.f32.mxu0 0.0
    %374 = vmatmul.mubr.f32.gmra.mxu0 %v262
    %v375 = vpop.f32.mrf.mxu0
    %v376 = vadd.f32 %v297, %v375
    %v377 = vpop.f32.mrf.mxu0
    %378 = vmatprep.mubr.f32.mxu0 0.0
    %379 = vmatmul.mubr.f32.gmra.mxu0 %v263
    %v380 = vpop.f32.mrf.mxu0
    %v381 = vadd.f32 %v297, %v380
    %v382 = vpop.f32.mrf.mxu0
    %383 = vmatprep.mubr.f32.mxu0 0.0
    %384 = vmatmul.mubr.f32.gmra.mxu0 %v264
    %v385 = vpop.f32.mrf.mxu0
    %v386 = vadd.f32 %v297, %v385
    %v387 = vpop.f32.mrf.mxu0
    %388 = vmatprep.mubr.f32.mxu0 0.0
    %389 = vmatmul.mubr.f32.gmra.mxu0 %v265
    %v390 = vpop.f32.mrf.mxu0
    %v391 = vadd.f32 %v297, %v390
    %v392 = vpop.f32.mrf.mxu0
    %393 = vmatprep.mubr.f32.mxu0 0.0
    %394 = vmatmul.mubr.f32.gmra.mxu0 %v266
    %v395 = vpop.f32.mrf.mxu0
    %v396 = vadd.f32 %v297, %v395
    %v397 = vpop.f32.mrf.mxu0
    %398 = vmatprep.mubr.f32.mxu0 0.0
    %399 = vmatmul.mubr.f32.gmra.mxu0 %v267
    %v400 = vpop.f32.mrf.mxu0
    %v401 = vadd.f32 %v297, %v400
    %v402 = vpop.f32.mrf.mxu0
    %403 = vmatprep.mubr.f32.mxu0 0.0
    %404 = vmatmul.mubr.f32.gmra.mxu0 %v268
    %v405 = vpop.f32.mrf.mxu0
    %v406 = vadd.f32 %v297, %v405
    %v407 = vpop.f32.mrf.mxu0
    %408 = vmatprep.mubr.f32.mxu0 0.0
    %409 = vmatmul.mubr.f32.gmra.mxu0 %v269
    %v410 = vpop.f32.mrf.mxu0
    %v411 = vadd.f32 %v297, %v410
    %v412 = vpop.f32.mrf.mxu0
    %413 = vmatprep.mubr.f32.mxu0 0.0
    %414 = vmatmul.mubr.f32.gmra.mxu0 %v270
    %v415 = vpop.f32.mrf.mxu0
    %v416 = vadd.f32 %v297, %v415
    %v417 = vpop.f32.mrf.mxu0
    %418 = vmatprep.mubr.f32.mxu0 0.0
    %419 = vmatmul.mubr.f32.gmra.mxu0 %v271
    %v420 = vpop.f32.mrf.mxu0
    %v421 = vadd.f32 %v297, %v420
    %v422 = vpop.f32.mrf.mxu0
    %423 = vmatprep.mubr.f32.mxu0 0.0
    %424 = vmatmul.mubr.f32.gmra.mxu0 %v272
    %v425 = vpop.f32.mrf.mxu0
    %v426 = vadd.f32 %v297, %v425
    %v427 = vpop.f32.mrf.mxu0
    %428 = vmatprep.mubr.f32.mxu0 0.0
    %429 = vmatmul.mubr.f32.gmra.mxu0 %v273
    %v430 = vpop.f32.mrf.mxu0
    %v431 = vadd.f32 %v297, %v430
    %v432 = vpop.f32.mrf.mxu0
    %433 = vmatprep.mubr.f32.mxu0 0.0
    %434 = vmatmul.mubr.f32.gmra.mxu0 %v274
    %v435 = vpop.f32.mrf.mxu0
    %v436 = vadd.f32 %v297, %v435
    %v437 = vpop.f32.mrf.mxu0
    %438 = vmatprep.mubr.f32.mxu0 0.0
    %439 = vmatmul.mubr.f32.gmra.mxu0 %v275
    %v440 = vpop.f32.mrf.mxu0
    %v441 = vadd.f32 %v297, %v440
    %v442 = vpop.f32.mrf.mxu0
    %443 = vdwg.mxu0
    %v444 = vmax.f32 %v366, 0.0
    %v445 = vmax.f32 %v371, 0.0
    %v446 = vmax.f32 %v376, 0.0
    %v447 = vmax.f32 %v381, 0.0
    %v448 = vmax.f32 %v386, 0.0
    %v449 = vmax.f32 %v391, 0.0
    %v450 = vmax.f32 %v396, 0.0
    %v451 = vmax.f32 %v401, 0.0
    %v452 = vmax.f32 %v406, 0.0
    %v453 = vmax.f32 %v411, 0.0
    %v454 = vmax.f32 %v416, 0.0
    %v455 = vmax.f32 %v421, 0.0
    %v456 = vmax.f32 %v426, 0.0
    %v457 = vmax.f32 %v431, 0.0
    %v458 = vmax.f32 %v436, 0.0
    %v459 = vmax.f32 %v441, 0.0
    %v460 = vld [vmem:[#allocation2] sm:$0xff]
    %v461 = vld [vmem:[#allocation2 + $0x8] sm:$0xff]
    %v462 = vld [vmem:[#allocation2 + $0x10] sm:$0xff]
    %v463 = vld [vmem:[#allocation2 + $0x18] sm:$0xff]
    %v464 = vld [vmem:[#allocation2 + $0x20] sm:$0xff]
    %v465 = vld [vmem:[#allocation2 + $0x28] sm:$0xff]
    %v466 = vld [vmem:[#allocation2 + $0x30] sm:$0xff]
    %v467 = vld [vmem:[#allocation2 + $0x38] sm:$0xff]
    %v468 = vld [vmem:[#allocation2 + $0x40] sm:$0xff]
    %v469 = vld [vmem:[#allocation2 + $0x48] sm:$0xff]
    %v470 = vld [vmem:[#allocation2 + $0x50] sm:$0xff]
    %v471 = vld [vmem:[#allocation2 + $0x58] sm:$0xff]
    %v472 = vld [vmem:[#allocation2 + $0x60] sm:$0xff]
    %v473 = vld [vmem:[#allocation2 + $0x68] sm:$0xff]
    %v474 = vld [vmem:[#allocation2 + $0x70] sm:$0xff]
    %v475 = vld [vmem:[#allocation2 + $0x78] sm:$0xff]
    %v476 = vld [vmem:[%s6] sm:$0x1]
    %v478 = vlaneseq
    %v479 = vshrl.u32 %v478, 7
    %v480 = vsub.s32 0, %v479
    %v481 = vrot.slane %v476, %v480
    %483 = vmatprep.subr.mxu0 0.0
    %484 = vmatpush1.msra.mxu0 %v475
    %485 = vmatprep.subr.mxu0 0.0
    %486 = vmatpush1.msra.mxu0 %v474
    %487 = vmatprep.subr.mxu0 0.0
    %488 = vmatpush1.msra.mxu0 %v473
    %489 = vmatprep.subr.mxu0 0.0
    %490 = vmatpush1.msra.mxu0 %v472
    %491 = vmatprep.subr.mxu0 0.0
    %492 = vmatpush1.msra.mxu0 %v471
    %493 = vmatprep.subr.mxu0 0.0
    %494 = vmatpush1.msra.mxu0 %v470
    %495 = vmatprep.subr.mxu0 0.0
    %496 = vmatpush1.msra.mxu0 %v469
    %497 = vmatprep.subr.mxu0 0.0
    %498 = vmatpush1.msra.mxu0 %v468
    %499 = vmatprep.subr.mxu0 0.0
    %500 = vmatpush1.msra.mxu0 %v467
    %501 = vmatprep.subr.mxu0 0.0
    %502 = vmatpush1.msra.mxu0 %v466
    %503 = vmatprep.subr.mxu0 0.0
    %504 = vmatpush1.msra.mxu0 %v465
    %505 = vmatprep.subr.mxu0 0.0
    %506 = vmatpush1.msra.mxu0 %v464
    %507 = vmatprep.subr.mxu0 0.0
    %508 = vmatpush1.msra.mxu0 %v463
    %509 = vmatprep.subr.mxu0 0.0
    %510 = vmatpush1.msra.mxu0 %v462
    %511 = vmatprep.subr.mxu0 0.0
    %512 = vmatpush1.msra.mxu0 %v461
    %513 = vmatprep.subr.mxu0 0.0
    %514 = vmatpush1.msra.mxu0 %v460
    %515 = vmatprep.subr.mxu0 0.0
    %516 = vmatpush2.msra.mxu0 0.0
    %517 = vmatprep.subr.mxu0 0.0
    %518 = vmatpush2.msra.mxu0 0.0
    %519 = vmatprep.subr.mxu0 0.0
    %520 = vmatpush2.msra.mxu0 0.0
    %521 = vmatprep.subr.mxu0 0.0
    %522 = vmatpush2.msra.mxu0 0.0
    %523 = vmatprep.subr.mxu0 0.0
    %524 = vmatpush2.msra.mxu0 0.0
    %525 = vmatprep.subr.mxu0 0.0
    %526 = vmatpush2.msra.mxu0 0.0
    %527 = vmatprep.subr.mxu0 0.0
    %528 = vmatpush2.msra.mxu0 0.0
    %529 = vmatprep.subr.mxu0 0.0
    %530 = vmatpush2.msra.mxu0 0.0
    %531 = vmatprep.subr.mxu0 0.0
    %532 = vmatpush2.msra.mxu0 0.0
    %533 = vmatprep.subr.mxu0 0.0
    %534 = vmatpush2.msra.mxu0 0.0
    %535 = vmatprep.subr.mxu0 0.0
    %536 = vmatpush2.msra.mxu0 0.0
    %537 = vmatprep.subr.mxu0 0.0
    %538 = vmatpush2.msra.mxu0 0.0
    %539 = vmatprep.subr.mxu0 0.0
    %540 = vmatpush2.msra.mxu0 0.0
    %541 = vmatprep.subr.mxu0 0.0
    %542 = vmatpush2.msra.mxu0 0.0
    %543 = vmatprep.subr.mxu0 0.0
    %544 = vmatpush2.msra.mxu0 0.0
    %545 = vmatprep.subr.mxu0 0.0
    %546 = vmatpush2.msra.mxu0 0.0
    %547 = vmatprep.mubr.f32.mxu0 0.0
    %548 = vmatmul.mubr.f32.gmra.mxu0 %v444
    %v549 = vpop.f32.mrf.mxu0
    %v550 = vadd.f32 %v481, %v549
    %v551 = vpop.f32.mrf.mxu0
    %552 = vmatprep.mubr.f32.mxu0 0.0
    %553 = vmatmul.mubr.f32.gmra.mxu0 %v445
    %v554 = vpop.f32.mrf.mxu0
    %v555 = vadd.f32 %v481, %v554
    %v556 = vpop.f32.mrf.mxu0
    %557 = vmatprep.mubr.f32.mxu0 0.0
    %558 = vmatmul.mubr.f32.gmra.mxu0 %v446
    %v559 = vpop.f32.mrf.mxu0
    %v560 = vadd.f32 %v481, %v559
    %v561 = vpop.f32.mrf.mxu0
    %562 = vmatprep.mubr.f32.mxu0 0.0
    %563 = vmatmul.mubr.f32.gmra.mxu0 %v447
    %v564 = vpop.f32.mrf.mxu0
    %v565 = vadd.f32 %v481, %v564
    %v566 = vpop.f32.mrf.mxu0
    %567 = vmatprep.mubr.f32.mxu0 0.0
    %568 = vmatmul.mubr.f32.gmra.mxu0 %v448
    %v569 = vpop.f32.mrf.mxu0
    %v570 = vadd.f32 %v481, %v569
    %v571 = vpop.f32.mrf.mxu0
    %572 = vmatprep.mubr.f32.mxu0 0.0
    %573 = vmatmul.mubr.f32.gmra.mxu0 %v449
    %v574 = vpop.f32.mrf.mxu0
    %v575 = vadd.f32 %v481, %v574
    %v576 = vpop.f32.mrf.mxu0
    %577 = vmatprep.mubr.f32.mxu0 0.0
    %578 = vmatmul.mubr.f32.gmra.mxu0 %v450
    %v579 = vpop.f32.mrf.mxu0
    %v580 = vadd.f32 %v481, %v579
    %v581 = vpop.f32.mrf.mxu0
    %582 = vmatprep.mubr.f32.mxu0 0.0
    %583 = vmatmul.mubr.f32.gmra.mxu0 %v451
    %v584 = vpop.f32.mrf.mxu0
    %v585 = vadd.f32 %v481, %v584
    %v586 = vpop.f32.mrf.mxu0
    %587 = vmatprep.mubr.f32.mxu0 0.0
    %588 = vmatmul.mubr.f32.gmra.mxu0 %v452
    %v589 = vpop.f32.mrf.mxu0
    %v590 = vadd.f32 %v481, %v589
    %v591 = vpop.f32.mrf.mxu0
    %592 = vmatprep.mubr.f32.mxu0 0.0
    %593 = vmatmul.mubr.f32.gmra.mxu0 %v453
    %v594 = vpop.f32.mrf.mxu0
    %v595 = vadd.f32 %v481, %v594
    %v596 = vpop.f32.mrf.mxu0
    %597 = vmatprep.mubr.f32.mxu0 0.0
    %598 = vmatmul.mubr.f32.gmra.mxu0 %v454
    %v599 = vpop.f32.mrf.mxu0
    %v600 = vadd.f32 %v481, %v599
    %v601 = vpop.f32.mrf.mxu0
    %602 = vmatprep.mubr.f32.mxu0 0.0
    %603 = vmatmul.mubr.f32.gmra.mxu0 %v455
    %v604 = vpop.f32.mrf.mxu0
    %v605 = vadd.f32 %v481, %v604
    %v606 = vpop.f32.mrf.mxu0
    %607 = vmatprep.mubr.f32.mxu0 0.0
    %608 = vmatmul.mubr.f32.gmra.mxu0 %v456
    %v609 = vpop.f32.mrf.mxu0
    %v610 = vadd.f32 %v481, %v609
    %v611 = vpop.f32.mrf.mxu0
    %612 = vmatprep.mubr.f32.mxu0 0.0
    %613 = vmatmul.mubr.f32.gmra.mxu0 %v457
    %v614 = vpop.f32.mrf.mxu0
    %v615 = vadd.f32 %v481, %v614
    %v616 = vpop.f32.mrf.mxu0
    %617 = vmatprep.mubr.f32.mxu0 0.0
    %618 = vmatmul.mubr.f32.gmra.mxu0 %v458
    %v619 = vpop.f32.mrf.mxu0
    %v620 = vadd.f32 %v481, %v619
    %v621 = vpop.f32.mrf.mxu0
    %622 = vmatprep.mubr.f32.mxu0 0.0
    %623 = vmatmul.mubr.f32.gmra.mxu0 %v459
    %v624 = vpop.f32.mrf.mxu0
    %v625 = vadd.f32 %v481, %v624
    %v626 = vpop.f32.mrf.mxu0
    %627 = vdwg.mxu0
    %628 = vmax.xlane.f32.xlu0 %v550
    %v629 = vpop.xlane.xlu0 %628
    %630 = vmax.xlane.f32.xlu0 %v555
    %v631 = vpop.xlane.xlu0 %630
    %632 = vmax.xlane.f32.xlu0 %v560
    %v633 = vpop.xlane.xlu0 %632
    %634 = vmax.xlane.f32.xlu0 %v565
    %v635 = vpop.xlane.xlu0 %634
    %636 = vmax.xlane.f32.xlu0 %v570
    %v637 = vpop.xlane.xlu0 %636
    %638 = vmax.xlane.f32.xlu0 %v575
    %v639 = vpop.xlane.xlu0 %638
    %640 = vmax.xlane.f32.xlu0 %v580
    %v641 = vpop.xlane.xlu0 %640
    %642 = vmax.xlane.f32.xlu0 %v585
    %v643 = vpop.xlane.xlu0 %642
    %644 = vmax.xlane.f32.xlu0 %v590
    %v645 = vpop.xlane.xlu0 %644
    %646 = vmax.xlane.f32.xlu0 %v595
    %v647 = vpop.xlane.xlu0 %646
    %648 = vmax.xlane.f32.xlu0 %v600
    %v649 = vpop.xlane.xlu0 %648
    %650 = vmax.xlane.f32.xlu0 %v605
    %v651 = vpop.xlane.xlu0 %650
    %652 = vmax.xlane.f32.xlu0 %v610
    %v653 = vpop.xlane.xlu0 %652
    %654 = vmax.xlane.f32.xlu0 %v615
    %v655 = vpop.xlane.xlu0 %654
    %656 = vmax.xlane.f32.xlu0 %v620
    %v657 = vpop.xlane.xlu0 %656
    %658 = vmax.xlane.f32.xlu0 %v625
    %v659 = vpop.xlane.xlu0 %658
    %v660 = vsub.f32 %v550, %v629
    %v661 = vsub.f32 %v555, %v631
    %v662 = vsub.f32 %v560, %v633
    %v663 = vsub.f32 %v565, %v635
    %v664 = vsub.f32 %v570, %v637
    %v665 = vsub.f32 %v575, %v639
    %v666 = vsub.f32 %v580, %v641
    %v667 = vsub.f32 %v585, %v643
    %v668 = vsub.f32 %v590, %v645
    %v669 = vsub.f32 %v595, %v647
    %v670 = vsub.f32 %v600, %v649
    %v671 = vsub.f32 %v605, %v651
    %v672 = vsub.f32 %v610, %v653
    %v673 = vsub.f32 %v615, %v655
    %v674 = vsub.f32 %v620, %v657
    %v675 = vsub.f32 %v625, %v659
    %v676 = vmul.f32 %v660, 1.442695
    %v677 = vpow.pop %v676
    %v678 = vmul.f32 %v661, 1.442695
    %v679 = vpow.pop %v678
    %v680 = vmul.f32 %v662, 1.442695
    %v681 = vpow.pop %v680
    %v682 = vmul.f32 %v663, 1.442695
    %v683 = vpow.pop %v682
    %v684 = vmul.f32 %v664, 1.442695
    %v685 = vpow.pop %v684
    %v686 = vmul.f32 %v665, 1.442695
    %v687 = vpow.pop %v686
    %v688 = vmul.f32 %v666, 1.442695
    %v689 = vpow.pop %v688
    %v690 = vmul.f32 %v667, 1.442695
    %v691 = vpow.pop %v690
    %v692 = vmul.f32 %v668, 1.442695
    %v693 = vpow.pop %v692
    %v694 = vmul.f32 %v669, 1.442695
    %v695 = vpow.pop %v694
    %v696 = vmul.f32 %v670, 1.442695
    %v697 = vpow.pop %v696
    %v698 = vmul.f32 %v671, 1.442695
    %v699 = vpow.pop %v698
    %v700 = vmul.f32 %v672, 1.442695
    %v701 = vpow.pop %v700
    %v702 = vmul.f32 %v673, 1.442695
    %v703 = vpow.pop %v702
    %v704 = vmul.f32 %v674, 1.442695
    %v705 = vpow.pop %v704
    %v706 = vmul.f32 %v675, 1.442695
    %v707 = vpow.pop %v706
    %708 = vadd.xlane.f32.xlu0 %v677
    %v709 = vpop.xlane.xlu0 %708
    %710 = vadd.xlane.f32.xlu0 %v679
    %v711 = vpop.xlane.xlu0 %710
    %712 = vadd.xlane.f32.xlu0 %v681
    %v713 = vpop.xlane.xlu0 %712
    %714 = vadd.xlane.f32.xlu0 %v683
    %v715 = vpop.xlane.xlu0 %714
    %716 = vadd.xlane.f32.xlu0 %v685
    %v717 = vpop.xlane.xlu0 %716
    %718 = vadd.xlane.f32.xlu0 %v687
    %v719 = vpop.xlane.xlu0 %718
    %720 = vadd.xlane.f32.xlu0 %v689
    %v721 = vpop.xlane.xlu0 %720
    %722 = vadd.xlane.f32.xlu0 %v691
    %v723 = vpop.xlane.xlu0 %722
    %724 = vadd.xlane.f32.xlu0 %v693
    %v725 = vpop.xlane.xlu0 %724
    %726 = vadd.xlane.f32.xlu0 %v695
    %v727 = vpop.xlane.xlu0 %726
    %728 = vadd.xlane.f32.xlu0 %v697
    %v729 = vpop.xlane.xlu0 %728
    %730 = vadd.xlane.f32.xlu0 %v699
    %v731 = vpop.xlane.xlu0 %730
    %732 = vadd.xlane.f32.xlu0 %v701
    %v733 = vpop.xlane.xlu0 %732
    %734 = vadd.xlane.f32.xlu0 %v703
    %v735 = vpop.xlane.xlu0 %734
    %736 = vadd.xlane.f32.xlu0 %v705
    %v737 = vpop.xlane.xlu0 %736
    %738 = vadd.xlane.f32.xlu0 %v707
    %v739 = vpop.xlane.xlu0 %738
    %v740 = vrcp.pop %v709
    %v741 = vrcp.pop %v711
    %v742 = vrcp.pop %v713
    %v743 = vrcp.pop %v715
    %v744 = vrcp.pop %v717
    %v745 = vrcp.pop %v719
    %v746 = vrcp.pop %v721
    %v747 = vrcp.pop %v723
    %v748 = vrcp.pop %v725
    %v749 = vrcp.pop %v727
    %v750 = vrcp.pop %v729
    %v751 = vrcp.pop %v731
    %v752 = vrcp.pop %v733
    %v753 = vrcp.pop %v735
    %v754 = vrcp.pop %v737
    %v755 = vrcp.pop %v739
    %v756 = vmul.f32 %v677, %v740
    %v757 = vmul.f32 %v679, %v741
    %v758 = vmul.f32 %v681, %v742
    %v759 = vmul.f32 %v683, %v743
    %v760 = vmul.f32 %v685, %v744
    %v761 = vmul.f32 %v687, %v745
    %v762 = vmul.f32 %v689, %v746
    %v763 = vmul.f32 %v691, %v747
    %v764 = vmul.f32 %v693, %v748
    %v765 = vmul.f32 %v695, %v749
    %v766 = vmul.f32 %v697, %v750
    %v767 = vmul.f32 %v699, %v751
    %v768 = vmul.f32 %v701, %v752
    %v769 = vmul.f32 %v703, %v753
    %v770 = vmul.f32 %v705, %v754
    %v771 = vmul.f32 %v707, %v755
    %772 = vxpose.xlu0.b32.start [1/16] %v756, 128
    %773 = vxpose.xlu0.b32.cont [2/16] %v757, 128
    %774 = vxpose.xlu0.b32.cont [3/16] %v758, 128
    %775 = vxpose.xlu0.b32.cont [4/16] %v759, 128
    %776 = vxpose.xlu0.b32.cont [5/16] %v760, 128
    %777 = vxpose.xlu0.b32.cont [6/16] %v761, 128
    %778 = vxpose.xlu0.b32.cont [7/16] %v762, 128
    %779 = vxpose.xlu0.b32.cont [8/16] %v763, 128
    %780 = vxpose.xlu0.b32.cont [9/16] %v764, 128
    %781 = vxpose.xlu0.b32.cont [10/16] %v765, 128
    %782 = vxpose.xlu0.b32.cont [11/16] %v766, 128
    %783 = vxpose.xlu0.b32.cont [12/16] %v767, 128
    %784 = vxpose.xlu0.b32.cont [13/16] %v768, 128
    %785 = vxpose.xlu0.b32.cont [14/16] %v769, 128
    %786 = vxpose.xlu0.b32.cont [15/16] %v770, 128
    %787 = vxpose.xlu0.b32.end [16/16] %v771, 128
    %v788 = vpop.trf.xlu0
    %v789 = vpop.trf.xlu0
    %v790 = vpop.trf.xlu0
    %v791 = vpop.trf.xlu0
    %v792 = vpop.trf.xlu0
    %v793 = vpop.trf.xlu0
    %v794 = vpop.trf.xlu0
    %v795 = vpop.trf.xlu0
    %v796 = vpop.trf.xlu0
    %v797 = vpop.trf.xlu0
    %v798 = vpop.trf.xlu0
    %v799 = vpop.trf.xlu0
    %v800 = vpop.trf.xlu0
    %v801 = vpop.trf.xlu0
    %v802 = vpop.trf.xlu0
    %v803 = vpop.trf.xlu0
    %804 = vst [vmem:[#allocation5] sm:$0xff] %v788
    // Predicated region
    $region34: #{tpu_custom_call.1} parent=1 // pred_check
      _
    $region35: #{tpu_custom_call.1} parent=1 // pred_check_branch
      %806 = sbr.rel (0) target = $region37
    $region36: #{tpu_custom_call.1} parent=1 // pred_region
      %s808 = ssub.s32 128, 128
      %809 = vsyncadd [#allocation4], %s808
      %s811 = sshll.u32 [#allocation5], 4
      %s812 = int_to_ptr.vmem [resolvable:$true] %s811
      %814 = dma.vmem_to_hbm [thread:$0]  %s812, 128, %s7, [#allocation4]
    $region37: #{tpu_custom_call.1} parent=1 // pred_fallthru
      _
    // Predicated region
    $region38: #{tpu_custom_call.1} parent=1 // pred_check
      _
    $region39: #{tpu_custom_call.1} parent=1 // pred_check_branch
      %816 = sbr.rel (0) target = $region41
    $region40: #{tpu_custom_call.1} parent=1 // pred_region
      %817 = dma.done [#allocation4], 128
    $region41: #{tpu_custom_call.1} parent=1 // pred_fallthru
      _
    %818 = vsyncpa [#allocation3], 1
    %819 = vsyncpa [#allocation4], 1

</llo_original>
